<compile_context>
chip_gen: v5e
topology: v5e:2x2
jax: 0.10.0
libtpu: 0.0.40
codegen_flags: <defaults>
</compile_context>

<pallas_src>
import functools

import jax
import jax.numpy as jnp
from jax.experimental import pallas as pl
from jax.experimental.pallas import tpu as pltpu


def _graph_classifier_kernel(x_ref, w_enc_ref, b_enc_ref, w_cls_ref, b_cls_ref,
                             out_ref, *, n_nodes: int):
    # x_ref:     (B_BLK * N, F)   node features of B_BLK graphs, node axis folded in
    # w_enc_ref: (F, E)           encoder weight (resident; constant index_map)
    # b_enc_ref: (1, E)           encoder bias
    # w_cls_ref: (E, C_pad)       classifier weight (lane-padded)
    # b_cls_ref: (1, C_pad)       classifier bias
    # out_ref:   (B_BLK, C_pad)   logits slab for B_BLK graphs
    bn = x_ref.shape[0]
    b_blk = bn // n_nodes
    emb = w_enc_ref.shape[1]

    # Encoder: one [B_BLK*N, F] @ [F, E] MXU matmul, f32 accumulation.
    h = jnp.dot(x_ref[...], w_enc_ref[...], preferred_element_type=jnp.float32)
    h = jnp.maximum(h + b_enc_ref[...], 0.0)                 # f32 epilogue (v5e-safe)

    # Graph readout: mean pool per graph as a sublane (XLU) reduction.
    g = jnp.sum(h.reshape(b_blk, n_nodes, emb), axis=1) * jnp.float32(1.0 / n_nodes)

    # Classifier: [B_BLK, E] @ [E, C_pad] + bias, stored as one lane-dense slab.
    logits = jnp.dot(g, w_cls_ref[...], preferred_element_type=jnp.float32)
    out_ref[...] = (logits + b_cls_ref[...]).astype(out_ref.dtype)


def _pick_b_blk(B_pad, N, F, E, C_pad):
    """Largest multiple-of-8 divisor of B_pad that fits a conservative VMEM
    budget, preferring >= 2 grid steps (keeps both v7x TCs busy)."""
    budget = 6 * 1024 * 1024  # bytes; safe under v5e's 16 MiB scoped default

    def step_bytes(d):
        x_blk = 2 * d * N * F          # double-buffered input block
        h_act = 2 * d * N * E          # f32 activation + temporaries
        out_blk = 2 * d * C_pad        # double-buffered output slab
        wts = F * E + E + E * C_pad + C_pad
        return 4 * (x_blk + h_act + out_blk + wts)

    divisors = [d for d in range(8, B_pad + 1, 8)
                if B_pad % d == 0 and step_bytes(d) <= budget]
    if not divisors:
        return 8
    two_step = [d for d in divisors if B_pad // d >= 2]
    return max(two_step) if two_step else max(divisors)


def graph_classifier_forward(x, w_enc, b_enc, w_cls, b_cls, *, b_blk=None):
    """x: [B, N, F] float32 node features -> logits [B, num_classes]."""
    B, N, F = x.shape
    E = w_enc.shape[1]
    C = w_cls.shape[1]

    # Pad batch to a multiple of 8 so every block keeps dense (8,128) tiling.
    B_pad = ((B + 7) // 8) * 8
    if B_pad != B:
        x = jnp.pad(x, ((0, B_pad - B), (0, 0), (0, 0)))

    # Zero-pad classifier out-dim to 128 lanes for unmasked output stores.
    C_pad = ((C + 127) // 128) * 128
    w_cls_p = jnp.pad(w_cls, ((0, 0), (0, C_pad - C)))
    b_cls_p = jnp.pad(b_cls, ((0, 0), (0, C_pad - C)))

    if b_blk is None:
        b_blk = _pick_b_blk(B_pad, N, F, E, C_pad)
    assert B_pad % b_blk == 0 and b_blk % 8 == 0
    grid = (B_pad // b_blk,)

    # Fold the node axis into the batch axis at the wrapper boundary so the
    # kernel receives a clean 2-D [B_BLK*N, F] tile (no in-kernel input reshape).
    x2d = x.reshape(B_pad * N, F)

    kernel = functools.partial(_graph_classifier_kernel, n_nodes=N)

    logits_pad = pl.pallas_call(
        kernel,
        out_shape=jax.ShapeDtypeStruct((B_pad, C_pad), jnp.float32),
        grid=grid,
        in_specs=[
            pl.BlockSpec((b_blk * N, F), lambda b: (b, 0)),  # nodes of B_BLK graphs
            pl.BlockSpec((F, E), lambda b: (0, 0)),          # shared W_enc (resident)
            pl.BlockSpec((1, E), lambda b: (0, 0)),          # shared b_enc
            pl.BlockSpec((E, C_pad), lambda b: (0, 0)),      # shared W_cls (padded)
            pl.BlockSpec((1, C_pad), lambda b: (0, 0)),      # shared b_cls (padded)
        ],
        out_specs=pl.BlockSpec((b_blk, C_pad), lambda b: (b, 0)),
        compiler_params=pltpu.CompilerParams(
            dimension_semantics=("parallel",)),
    )(x2d, w_enc, b_enc, w_cls_p, b_cls_p)

    return logits_pad[:B, :C]


def reference_forward(x, w_enc, b_enc, w_cls, b_cls):
    h = jnp.maximum(jnp.einsum("bnf,fe->bne", x, w_enc) + b_enc, 0.0)
    g = jnp.mean(h, axis=1)
    return g @ w_cls + b_cls


if __name__ == "__main__":
    # Small shapes consistent with the forward pass; B chosen so the default
    # blocking gives B_BLK=8 and a 2-step grid (both v7x TCs busy).
    B, N, F = 16, 8, 16          # graphs, nodes per graph, node feature dim
    emb_dim, num_classes = 32, 8

    key = jax.random.PRNGKey(0)
    kx, k1, k2, k3, k4 = jax.random.split(key, 5)

    x = jax.random.normal(kx, (B, N, F), dtype=jnp.float32)
    # Deterministic parameter init (synthetic, not a checkpoint load).
    w_enc = jax.random.normal(k1, (F, emb_dim), dtype=jnp.float32) * 0.1
    b_enc = jax.random.normal(k2, (1, emb_dim), dtype=jnp.float32) * 0.01
    w_cls = jax.random.normal(k3, (emb_dim, num_classes), dtype=jnp.float32) * 0.1
    b_cls = jax.random.normal(k4, (1, num_classes), dtype=jnp.float32) * 0.01

    logits = graph_classifier_forward(x, w_enc, b_enc, w_cls, b_cls)
    jax.block_until_ready(logits)

    ref = reference_forward(x, w_enc, b_enc, w_cls, b_cls)
    assert logits.shape == (B, num_classes)
    assert jnp.allclose(logits, ref, atol=1e-5, rtol=1e-5), "mismatch vs reference"

    print("KERNEL_OK")
</pallas_src>

<mosaic_0001>
module attributes {stable_mosaic.version = 11 : i64} {
  func.func @_graph_classifier_kernel(%arg0: i32, %arg1: memref<64x16xf32, #tpu.memory_space<vmem>>, %arg2: memref<16x32xf32, #tpu.memory_space<vmem>>, %arg3: memref<1x32xf32, #tpu.memory_space<vmem>>, %arg4: memref<32x128xf32, #tpu.memory_space<vmem>>, %arg5: memref<1x128xf32, #tpu.memory_space<vmem>>, %arg6: memref<8x128xf32, #tpu.memory_space<vmem>>) attributes {dimension_semantics = [#tpu.dimension_semantics<parallel>], iteration_bounds = array<i64: 2>, scalar_prefetch = 0 : i64, scratch_operands = 0 : i64, tpu.core_type = #tpu.core_type<tc>, window_params = [{transform_indices = @transform_0, window_bounds = array<i64: 64, 16>}, {pipeline_mode = #tpu.pipeline_mode<synchronous>, transform_indices = @transform_1, window_bounds = array<i64: 16, 32>}, {pipeline_mode = #tpu.pipeline_mode<synchronous>, transform_indices = @transform_2, window_bounds = array<i64: 1, 32>}, {pipeline_mode = #tpu.pipeline_mode<synchronous>, transform_indices = @transform_3, window_bounds = array<i64: 32, 128>}, {pipeline_mode = #tpu.pipeline_mode<synchronous>, transform_indices = @transform_4, window_bounds = array<i64: 1, 128>}, {transform_indices = @transform_5, window_bounds = array<i64: 8, 128>}]} {
    %c0 = arith.constant 0 : index
    %c0_0 = arith.constant 0 : index
    %0 = vector.load %arg1[%c0, %c0_0] : memref<64x16xf32, #tpu.memory_space<vmem>>, vector<64x16xf32>
    %c0_1 = arith.constant 0 : index
    %c0_2 = arith.constant 0 : index
    %1 = vector.load %arg2[%c0_1, %c0_2] : memref<16x32xf32, #tpu.memory_space<vmem>>, vector<16x32xf32>
    %cst = arith.constant dense<0.000000e+00> : vector<64x32xf32>
    %2 = tpu.matmul %0, %1, %cst {dimension_numbers = #tpu.dot_dimension_numbers<[1], [0], [0], [1], [0, 0, 1, 1], [], []>} : vector<64x16xf32>, vector<16x32xf32>, vector<64x32xf32> -> vector<64x32xf32>
    %c0_3 = arith.constant 0 : index
    %c0_4 = arith.constant 0 : index
    %3 = vector.load %arg3[%c0_3, %c0_4] : memref<1x32xf32, #tpu.memory_space<vmem>>, vector<1x32xf32>
    %4 = vector.broadcast %3 : vector<1x32xf32> to vector<64x32xf32>
    %5 = arith.addf %2, %4 : vector<64x32xf32>
    %cst_5 = arith.constant 0.000000e+00 : f32
    %6 = vector.broadcast %cst_5 : f32 to vector<64x32xf32>
    %7 = arith.maximumf %5, %6 : vector<64x32xf32>
    %8 = vector.shape_cast %7 : vector<64x32xf32> to vector<8x8x32xf32>
    %cst_6 = arith.constant dense<0.000000e+00> : vector<8x32xf32>
    %9 = vector.multi_reduction <add>, %8, %cst_6 [1] : vector<8x8x32xf32> to vector<8x32xf32>
    %cst_7 = arith.constant 1.250000e-01 : f32
    %10 = vector.broadcast %cst_7 : f32 to vector<8x32xf32>
    %11 = arith.mulf %9, %10 : vector<8x32xf32>
    %c0_8 = arith.constant 0 : index
    %c0_9 = arith.constant 0 : index
    %12 = vector.load %arg4[%c0_8, %c0_9] : memref<32x128xf32, #tpu.memory_space<vmem>>, vector<32x128xf32>
    %cst_10 = arith.constant dense<0.000000e+00> : vector<8x128xf32>
    %13 = tpu.matmul %11, %12, %cst_10 {dimension_numbers = #tpu.dot_dimension_numbers<[1], [0], [0], [1], [0, 0, 1, 1], [], []>} : vector<8x32xf32>, vector<32x128xf32>, vector<8x128xf32> -> vector<8x128xf32>
    %c0_11 = arith.constant 0 : index
    %c0_12 = arith.constant 0 : index
    %14 = vector.load %arg5[%c0_11, %c0_12] : memref<1x128xf32, #tpu.memory_space<vmem>>, vector<1x128xf32>
    %15 = vector.broadcast %14 : vector<1x128xf32> to vector<8x128xf32>
    %16 = arith.addf %13, %15 : vector<8x128xf32>
    %c0_13 = arith.constant 0 : index
    %c0_14 = arith.constant 0 : index
    %17 = vector.load %arg6[%c0_13, %c0_14] : memref<8x128xf32, #tpu.memory_space<vmem>>, vector<8x128xf32>
    tpu.vector_store %arg6[%c0_13, %c0_14], %16 {strides = array<i32>} : memref<8x128xf32, #tpu.memory_space<vmem>>, vector<8x128xf32>,
    return
  }
  func.func @transform_0(%arg0: i32) -> (i32, i32) {
    %c0_i32 = arith.constant 0 : i32
    %c0_i32_0 = arith.constant 0 : i32
    return %arg0, %c0_i32 : i32, i32
  }
  func.func @transform_1(%arg0: i32) -> (i32, i32) {
    %c0_i32 = arith.constant 0 : i32
    %c0_i32_0 = arith.constant 0 : i32
    %c0_i32_1 = arith.constant 0 : i32
    return %c0_i32, %c0_i32_0 : i32, i32
  }
  func.func @transform_2(%arg0: i32) -> (i32, i32) {
    %c0_i32 = arith.constant 0 : i32
    %c0_i32_0 = arith.constant 0 : i32
    %c0_i32_1 = arith.constant 0 : i32
    return %c0_i32, %c0_i32_0 : i32, i32
  }
  func.func @transform_3(%arg0: i32) -> (i32, i32) {
    %c0_i32 = arith.constant 0 : i32
    %c0_i32_0 = arith.constant 0 : i32
    %c0_i32_1 = arith.constant 0 : i32
    return %c0_i32, %c0_i32_0 : i32, i32
  }
  func.func @transform_4(%arg0: i32) -> (i32, i32) {
    %c0_i32 = arith.constant 0 : i32
    %c0_i32_0 = arith.constant 0 : i32
    %c0_i32_1 = arith.constant 0 : i32
    return %c0_i32, %c0_i32_0 : i32, i32
  }
  func.func @transform_5(%arg0: i32) -> (i32, i32) {
    %c0_i32 = arith.constant 0 : i32
    %c0_i32_0 = arith.constant 0 : i32
    return %arg0, %c0_i32 : i32, i32
  }
}

</mosaic_0001>

<llo_original>
// kernel: tpu_custom_call.1
$region0: #{tpu_custom_call.1}
  #allocation0 [shape = 'u32[]', space=smem, size = 0x4, offset = 0x4, fixed_abs, tag = 'smem constant byte address 0x4 - core index']
  #allocation1 [shape = 'u32[72,128]{1,0:T(1,128)}', space=vmem, size = 0x9000, scoped, tag = 'internal scratch']
  %s0 = inlined_call_operand.vmem [shape: f32[128,16], index: 0, kind: input, shape index: {}]
  %s1 = inlined_call_operand.vmem [shape: f32[16,32], index: 1, kind: input, shape index: {}]
  %s2 = inlined_call_operand.vmem [shape: f32[1,32], index: 2, kind: input, shape index: {}]
  %s3 = inlined_call_operand.vmem [shape: f32[32,128], index: 3, kind: input, shape index: {}]
  %s4 = inlined_call_operand.vmem [shape: f32[1,128], index: 4, kind: input, shape index: {}]
  %s5 = inlined_call_operand.hbm [shape: f32[16,128], index: 5, kind: output, shape index: {}]
  %s6 = sld [smem:[#allocation0]]
  $region53: #{tpu_custom_call.1} parent=0
    _
  %s8 = ssub.s32 1, %s6
  %s9 = scalar_select 0, %s8, %s6
  $region1: #{tpu_custom_call.1} parent=0
    #allocation2 [shape = 'u8[8192]{0}', space=vmem, size = 0x2000, scoped, tag = 'output window, operand 0']
    #allocation3 [shape = 's32[2]{0}', space=sflag, size = 0x8, scoped, tag = 'scoped memory for tpu_custom_call.1']
    %10 = vsyncpa [#allocation3], 0
    %s11 = scalar_lea.sflag [#allocation3], 1
    %12 = vsyncpa %s11, 0
    loop: start=0, step=1, limit=4
    $region2: #{tpu_custom_call.1} parent=1 // loop_pre_header
      _
    $region3: #{tpu_custom_call.1} parent=1 // loop_header
      %s14 = sphi 0, %s18
      %p15 = scmp.ge.s32.totalorder %s14, 4
      %s24 = sphi 0, %s26
      %s27 = sphi 0, %s24
      %s28 = sphi 0, %s27
      %s44 = sphi 0, %s28
      %s48 = sphi 0, %s48
      %s50 = sphi 0, %s48
      %s51 = sphi 0, %s50
      %s65 = sphi 0, %s51
      %s69 = sphi 0, %s69
      %s71 = sphi 0, %s69
      %s72 = sphi 0, %s71
      %s86 = sphi 0, %s72
      %s90 = sphi 0, %s90
      %s92 = sphi 0, %s90
      %s93 = sphi 0, %s92
      %s107 = sphi 0, %s93
      %s111 = sphi 0, %s111
      %s113 = sphi 0, %s111
      %s114 = sphi 0, %s113
      %s128 = sphi 0, %s114
      %s134 = sphi 0, %s136
      %s137 = sphi 0, %s134
      %s138 = sphi 0, %s137
      %s154 = sphi 0, %s138
    $region4: #{tpu_custom_call.1} parent=1 // loop_header_branch
      %17 = sbr.rel (%p15) target = $region8
    $region5: #{tpu_custom_call.1} parent=1 // loop_body
      %s19 = ssub.s32 %s14, 1
      %s20 = ssub.s32 %s14, 2
      %s21 = sadd.s32 %s14, 1
      %s22 = ssub.s32 %s14, %s21
      %p23 = scmp.eq.s32.totalorder %s22, 0
      %s25 = sadd.s32 %s24, 1
      %s26 = scalar_select %p23, %s24, %s25
      %p29 = pneg %p23
      %p30 = scmp.eq.s32.totalorder %s14, 1
      %p31 = por %p29, %p30
      %p32 = scmp.ne.s32.totalorder %s24, %s27
      %p33 = scmp.eq.s32.totalorder %s14, 0
      %p34 = por %p32, %p33
      %p35 = scmp.ne.s32.totalorder %s24, %s27
      %p36 = scmp.eq.s32.totalorder %s19, 1
      %p37 = por %p35, %p36
      %p38 = scmp.ne.s32.totalorder %s27, %s28
      %p39 = scmp.eq.s32.totalorder %s19, 0
      %p40 = por %p38, %p39
      %p41 = scmp.ne.s32.totalorder %s27, %s28
      %p42 = scmp.eq.s32.totalorder %s20, 1
      %p43 = por %p41, %p42
      %p45 = scmp.ne.s32.totalorder %s28, %s44
      %p46 = scmp.eq.s32.totalorder %s20, 0
      %p47 = por %p45, %p46
      %s49 = sadd.s32 %s48, 1
      %p52 = scmp.eq.s32.totalorder %s14, 1
      %p53 = scmp.ne.s32.totalorder %s48, %s50
      %p54 = scmp.eq.s32.totalorder %s14, 0
      %p55 = por %p53, %p54
      %p56 = scmp.ne.s32.totalorder %s48, %s50
      %p57 = scmp.eq.s32.totalorder %s19, 1
      %p58 = por %p56, %p57
      %p59 = scmp.ne.s32.totalorder %s50, %s51
      %p60 = scmp.eq.s32.totalorder %s19, 0
      %p61 = por %p59, %p60
      %p62 = scmp.ne.s32.totalorder %s50, %s51
      %p63 = scmp.eq.s32.totalorder %s20, 1
      %p64 = por %p62, %p63
      %p66 = scmp.ne.s32.totalorder %s51, %s65
      %p67 = scmp.eq.s32.totalorder %s20, 0
      %p68 = por %p66, %p67
      %s70 = sadd.s32 %s69, 1
      %p73 = scmp.eq.s32.totalorder %s14, 1
      %p74 = scmp.ne.s32.totalorder %s69, %s71
      %p75 = scmp.eq.s32.totalorder %s14, 0
      %p76 = por %p74, %p75
      %p77 = scmp.ne.s32.totalorder %s69, %s71
      %p78 = scmp.eq.s32.totalorder %s19, 1
      %p79 = por %p77, %p78
      %p80 = scmp.ne.s32.totalorder %s71, %s72
      %p81 = scmp.eq.s32.totalorder %s19, 0
      %p82 = por %p80, %p81
      %p83 = scmp.ne.s32.totalorder %s71, %s72
      %p84 = scmp.eq.s32.totalorder %s20, 1
      %p85 = por %p83, %p84
      %p87 = scmp.ne.s32.totalorder %s72, %s86
      %p88 = scmp.eq.s32.totalorder %s20, 0
      %p89 = por %p87, %p88
      %s91 = sadd.s32 %s90, 1
      %p94 = scmp.eq.s32.totalorder %s14, 1
      %p95 = scmp.ne.s32.totalorder %s90, %s92
      %p96 = scmp.eq.s32.totalorder %s14, 0
      %p97 = por %p95, %p96
      %p98 = scmp.ne.s32.totalorder %s90, %s92
      %p99 = scmp.eq.s32.totalorder %s19, 1
      %p100 = por %p98, %p99
      %p101 = scmp.ne.s32.totalorder %s92, %s93
      %p102 = scmp.eq.s32.totalorder %s19, 0
      %p103 = por %p101, %p102
      %p104 = scmp.ne.s32.totalorder %s92, %s93
      %p105 = scmp.eq.s32.totalorder %s20, 1
      %p106 = por %p104, %p105
      %p108 = scmp.ne.s32.totalorder %s93, %s107
      %p109 = scmp.eq.s32.totalorder %s20, 0
      %p110 = por %p108, %p109
      %s112 = sadd.s32 %s111, 1
      %p115 = scmp.eq.s32.totalorder %s14, 1
      %p116 = scmp.ne.s32.totalorder %s111, %s113
      %p117 = scmp.eq.s32.totalorder %s14, 0
      %p118 = por %p116, %p117
      %p119 = scmp.ne.s32.totalorder %s111, %s113
      %p120 = scmp.eq.s32.totalorder %s19, 1
      %p121 = por %p119, %p120
      %p122 = scmp.ne.s32.totalorder %s113, %s114
      %p123 = scmp.eq.s32.totalorder %s19, 0
      %p124 = por %p122, %p123
      %p125 = scmp.ne.s32.totalorder %s113, %s114
      %p126 = scmp.eq.s32.totalorder %s20, 1
      %p127 = por %p125, %p126
      %p129 = scmp.ne.s32.totalorder %s114, %s128
      %p130 = scmp.eq.s32.totalorder %s20, 0
      %p131 = por %p129, %p130
      %s132 = ssub.s32 %s14, %s21
      %p133 = scmp.eq.s32.totalorder %s132, 0
      %s135 = sadd.s32 %s134, 1
      %s136 = scalar_select %p133, %s134, %s135
      %p139 = pneg %p133
      %p140 = scmp.eq.s32.totalorder %s14, 1
      %p141 = por %p139, %p140
      %p142 = scmp.ne.s32.totalorder %s134, %s137
      %p143 = scmp.eq.s32.totalorder %s14, 0
      %p144 = por %p142, %p143
      %p145 = scmp.ne.s32.totalorder %s134, %s137
      %p146 = scmp.eq.s32.totalorder %s19, 1
      %p147 = por %p145, %p146
      %p148 = scmp.ne.s32.totalorder %s137, %s138
      %p149 = scmp.eq.s32.totalorder %s19, 0
      %p150 = por %p148, %p149
      %p151 = scmp.ne.s32.totalorder %s137, %s138
      %p152 = scmp.eq.s32.totalorder %s20, 1
      %p153 = por %p151, %p152
      %p155 = scmp.ne.s32.totalorder %s138, %s154
      %p156 = scmp.eq.s32.totalorder %s20, 0
      %p157 = por %p155, %p156
      %p158 = scmp.le.s32.totalorder 1, %s14
      %p159 = scmp.lt.s32.totalorder %s14, 3
      %p160 = pnand %p158, %p159
      %p161 = pneg %p160
      // Predicated region
      $region9: #{tpu_custom_call.1} parent=5 // pred_check
        _
      $region10: #{tpu_custom_call.1} parent=5 // pred_check_branch
        %163 = sbr.rel (%p160) target = $region12
      $region11: #{tpu_custom_call.1} parent=5 // pred_region
        %s164 = ssub.s32 %s14, 1
        // Predicated region
        $region13: #{tpu_custom_call.1} parent=11 // pred_check
          %p165 = pneg %p61
        $region14: #{tpu_custom_call.1} parent=11 // pred_check_branch
          %167 = sbr.rel (%p165) target = $region16
        $region15: #{tpu_custom_call.1} parent=11 // pred_region
          _
        $region16: #{tpu_custom_call.1} parent=11 // pred_fallthru
          _
        // Predicated region
        $region17: #{tpu_custom_call.1} parent=11 // pred_check
          %p168 = pneg %p82
        $region18: #{tpu_custom_call.1} parent=11 // pred_check_branch
          %170 = sbr.rel (%p168) target = $region20
        $region19: #{tpu_custom_call.1} parent=11 // pred_region
          _
        $region20: #{tpu_custom_call.1} parent=11 // pred_fallthru
          _
        // Predicated region
        $region21: #{tpu_custom_call.1} parent=11 // pred_check
          %p171 = pneg %p103
        $region22: #{tpu_custom_call.1} parent=11 // pred_check_branch
          %173 = sbr.rel (%p171) target = $region24
        $region23: #{tpu_custom_call.1} parent=11 // pred_region
          _
        $region24: #{tpu_custom_call.1} parent=11 // pred_fallthru
          _
        // Predicated region
        $region25: #{tpu_custom_call.1} parent=11 // pred_check
          %p174 = pneg %p124
        $region26: #{tpu_custom_call.1} parent=11 // pred_check_branch
          %176 = sbr.rel (%p174) target = $region28
        $region27: #{tpu_custom_call.1} parent=11 // pred_region
          _
        $region28: #{tpu_custom_call.1} parent=11 // pred_fallthru
          _
      $region12: #{tpu_custom_call.1} parent=5 // pred_fallthru
        _
      %p177 = scmp.lt.s32.totalorder %s14, 2
      // Predicated region
      $region29: #{tpu_custom_call.1} parent=5 // pred_check
        %p178 = pneg %p177
      $region30: #{tpu_custom_call.1} parent=5 // pred_check_branch
        %180 = sbr.rel (%p178) target = $region32
      $region31: #{tpu_custom_call.1} parent=5 // pred_region
        // Predicated region
        $region33: #{tpu_custom_call.1} parent=31 // pred_check
          %p181 = pneg %p34
        $region34: #{tpu_custom_call.1} parent=31 // pred_check_branch
          %183 = sbr.rel (%p181) target = $region36
        $region35: #{tpu_custom_call.1} parent=31 // pred_region
          %s184 = smul.u32 8, %s14
          %p185 = scmp.lt.s32.totalorder %s184, 15
          %s186 = scalar_select %p185, %s184, 15
          %s187 = smul.addr %s186, 8
          %s188 = scalar_lea.vmem %s0, %s187
          %s189 = smul.u32 8, %s14
        $region36: #{tpu_custom_call.1} parent=31 // pred_fallthru
          _
      $region32: #{tpu_custom_call.1} parent=5 // pred_fallthru
        _
      %p190 = scmp.le.s32.totalorder 1, %s14
      %p191 = scmp.lt.s32.totalorder %s14, 3
      %p192 = pnand %p190, %p191
      %p193 = pneg %p192
      // Predicated region
      $region37: #{tpu_custom_call.1} parent=5 // pred_check
        _
      $region38: #{tpu_custom_call.1} parent=5 // pred_check_branch
        %195 = sbr.rel (%p192) target = $region40
      $region39: #{tpu_custom_call.1} parent=5 // pred_region
        %s196 = ssub.s32 %s14, 1
        %s197 = smul.u32 8, %s19
        %p198 = scmp.lt.s32.totalorder %s197, 15
        %s199 = scalar_select %p198, %s197, 15
        %s200 = smul.addr %s199, 8
        %s201 = scalar_lea.vmem %s0, %s200
        %p202 = pneg %p40
        %p203 = pneg %p37
        %p204 = pneg %p61
        %p205 = pneg %p58
        %p206 = pneg %p82
        %p207 = pneg %p79
        %p208 = pneg %p103
        %p209 = pneg %p100
        %p210 = pneg %p124
        %p211 = pneg %p121
        %p212 = pneg %p150
        %p213 = pneg %p147
        %s214 = sand.u32 %s137, 1
        %s215 = scalar_lea.sflag [#allocation3], %s214
        %s216 = sand.u32 %s137, 1
        %s217 = smul.addr %s216, 8
        %s218 = scalar_lea.vmem [#allocation2], %s217
        %s219 = smul.u32 8, %s19
        %p220 = scmp.lt.s32.totalorder %s219, 15
        %s221 = scalar_select %p220, %s219, 15
        %s222 = smul.addr %s221, 8
        %s223 = scalar_lea.vmem %s0, %s222
        %s224 = smul.u32 8, %s19
        %v225 = vld [vmem:[%s223] sm:$0xff]
        %v226 = vld [vmem:[%s223 + $0x8] sm:$0xff]
        %v227 = vld [vmem:[%s223 + $0x10] sm:$0xff]
        %v228 = vld [vmem:[%s223 + $0x18] sm:$0xff]
        %v229 = vld [vmem:[%s223 + $0x20] sm:$0xff]
        %v230 = vld [vmem:[%s223 + $0x28] sm:$0xff]
        %v231 = vld [vmem:[%s223 + $0x30] sm:$0xff]
        %v232 = vld [vmem:[%s223 + $0x38] sm:$0xff]
        %v233 = vld [vmem:[%s1] sm:$0xff]
        %v234 = vld [vmem:[%s1 + $0x8] sm:$0xff]
        %v235 = vld [vmem:[%s2] sm:$0x1]
        %v237 = vperm.slane %v235, 0
        %vm239 = vcmask 130048
        %v241 = vsel %vm239, %v225, 0
        %v244 = vsel %vm239, %v226, 0
        %v247 = vsel %vm239, %v227, 0
        %v250 = vsel %vm239, %v228, 0
        %v253 = vsel %vm239, %v229, 0
        %v256 = vsel %vm239, %v230, 0
        %v259 = vsel %vm239, %v231, 0
        %v262 = vsel %vm239, %v232, 0
        %264 = vmatpush.msra.mxu0 0.0
        %265 = vmatpush.msra.mxu0 0.0
        %266 = vmatpush.msra.mxu0 0.0
        %267 = vmatpush.msra.mxu0 0.0
        %268 = vmatpush.msra.mxu0 0.0
        %269 = vmatpush.msra.mxu0 0.0
        %270 = vmatpush.msra.mxu0 0.0
        %271 = vmatpush.msra.mxu0 0.0
        %272 = vmatpush.msra.mxu0 0.0
        %273 = vmatpush.msra.mxu0 0.0
        %274 = vmatpush.msra.mxu0 0.0
        %275 = vmatpush.msra.mxu0 0.0
        %276 = vmatpush.msra.mxu0 0.0
        %277 = vmatpush.msra.mxu0 0.0
        %278 = vmatpush.msra.mxu0 %v234
        %279 = vmatpush.msra.mxu0 %v233
        %280 = vmatmul.f32.gmra.mxu0 %v241
        %v281 = vpop.f32.mrf.mxu0
        %v282 = vadd.f32 %v237, %v281
        %283 = vmatmul.f32.gmra.mxu0 %v244
        %v284 = vpop.f32.mrf.mxu0
        %v285 = vadd.f32 %v237, %v284
        %286 = vmatmul.f32.gmra.mxu0 %v247
        %v287 = vpop.f32.mrf.mxu0
        %v288 = vadd.f32 %v237, %v287
        %289 = vmatmul.f32.gmra.mxu0 %v250
        %v290 = vpop.f32.mrf.mxu0
        %v291 = vadd.f32 %v237, %v290
        %292 = vmatmul.f32.gmra.mxu0 %v253
        %v293 = vpop.f32.mrf.mxu0
        %v294 = vadd.f32 %v237, %v293
        %295 = vmatmul.f32.gmra.mxu0 %v256
        %v296 = vpop.f32.mrf.mxu0
        %v297 = vadd.f32 %v237, %v296
        %298 = vmatmul.f32.gmra.mxu0 %v259
        %v299 = vpop.f32.mrf.mxu0
        %v300 = vadd.f32 %v237, %v299
        %301 = vmatmul.f32.gmra.mxu0 %v262
        %v302 = vpop.f32.mrf.mxu0
        %v303 = vadd.f32 %v237, %v302
        %304 = vdwg.mxu0
        %v305 = vmax.f32 %v282, 0.0
        %v306 = vmax.f32 %v285, 0.0
        %v307 = vmax.f32 %v288, 0.0
        %v308 = vmax.f32 %v291, 0.0
        %v309 = vmax.f32 %v294, 0.0
        %v310 = vmax.f32 %v297, 0.0
        %v311 = vmax.f32 %v300, 0.0
        %v312 = vmax.f32 %v303, 0.0
        %vm313 = vcmask 261120
        %v314 = vsel %vm313, %v305, 0.0
        %v315 = vrot.slane %v314, 4
        %v316 = vadd.f32 %v314, %v315
        %v317 = vrot.slane %v316, 2
        %v318 = vadd.f32 %v316, %v317
        %v319 = vrot.slane %v318, 1
        %v320 = vadd.f32 %v318, %v319
        %v321 = vsel %vm313, %v306, 0.0
        %v322 = vrot.slane %v321, 4
        %v323 = vadd.f32 %v321, %v322
        %v324 = vrot.slane %v323, 2
        %v325 = vadd.f32 %v323, %v324
        %v326 = vrot.slane %v325, 1
        %v327 = vadd.f32 %v325, %v326
        %v328 = vsel %vm313, %v307, 0.0
        %v329 = vrot.slane %v328, 4
        %v330 = vadd.f32 %v328, %v329
        %v331 = vrot.slane %v330, 2
        %v332 = vadd.f32 %v330, %v331
        %v333 = vrot.slane %v332, 1
        %v334 = vadd.f32 %v332, %v333
        %v335 = vsel %vm313, %v308, 0.0
        %v336 = vrot.slane %v335, 4
        %v337 = vadd.f32 %v335, %v336
        %v338 = vrot.slane %v337, 2
        %v339 = vadd.f32 %v337, %v338
        %v340 = vrot.slane %v339, 1
        %v341 = vadd.f32 %v339, %v340
        %v342 = vsel %vm313, %v309, 0.0
        %v343 = vrot.slane %v342, 4
        %v344 = vadd.f32 %v342, %v343
        %v345 = vrot.slane %v344, 2
        %v346 = vadd.f32 %v344, %v345
        %v347 = vrot.slane %v346, 1
        %v348 = vadd.f32 %v346, %v347
        %v349 = vsel %vm313, %v310, 0.0
        %v350 = vrot.slane %v349, 4
        %v351 = vadd.f32 %v349, %v350
        %v352 = vrot.slane %v351, 2
        %v353 = vadd.f32 %v351, %v352
        %v354 = vrot.slane %v353, 1
        %v355 = vadd.f32 %v353, %v354
        %v356 = vsel %vm313, %v311, 0.0
        %v357 = vrot.slane %v356, 4
        %v358 = vadd.f32 %v356, %v357
        %v359 = vrot.slane %v358, 2
        %v360 = vadd.f32 %v358, %v359
        %v361 = vrot.slane %v360, 1
        %v362 = vadd.f32 %v360, %v361
        %v363 = vsel %vm313, %v312, 0.0
        %v364 = vrot.slane %v363, 4
        %v365 = vadd.f32 %v363, %v364
        %v366 = vrot.slane %v365, 2
        %v367 = vadd.f32 %v365, %v366
        %v368 = vrot.slane %v367, 1
        %v369 = vadd.f32 %v367, %v368
        %v370 = vmul.f32 %v320, 0.125
        %v371 = vmul.f32 %v327, 0.125
        %v372 = vmul.f32 %v334, 0.125
        %v373 = vmul.f32 %v341, 0.125
        %v374 = vmul.f32 %v348, 0.125
        %v375 = vmul.f32 %v355, 0.125
        %v376 = vmul.f32 %v362, 0.125
        %v377 = vmul.f32 %v369, 0.125
        %v378 = vld [vmem:[%s3] sm:$0xff]
        %v379 = vld [vmem:[%s3 + $0x8] sm:$0xff]
        %v380 = vld [vmem:[%s3 + $0x10] sm:$0xff]
        %v381 = vld [vmem:[%s3 + $0x18] sm:$0xff]
        %v382 = vld [vmem:[%s4] sm:$0x1]
        %v384 = vperm.slane %v382, 0
        %vm394 = vcmask 1041409
        %v395 = vsel %vm394, %v371, %v370
        %vm396 = vcmask 1042434
        %v397 = vsel %vm396, %v372, %v395
        %vm398 = vcmask 1043459
        %v399 = vsel %vm398, %v373, %v397
        %vm400 = vcmask 1044484
        %v401 = vsel %vm400, %v374, %v399
        %vm402 = vcmask 1045509
        %v403 = vsel %vm402, %v375, %v401
        %vm404 = vcmask 1046534
        %v405 = vsel %vm404, %v376, %v403
        %vm406 = vcmask 1047559
        %v407 = vsel %vm406, %v377, %v405
        %v408 = vsel %vm313, %v407, 0
        %410 = vmatpush.msra.mxu0 0.0
        %411 = vmatpush.msra.mxu0 0.0
        %412 = vmatpush.msra.mxu0 0.0
        %413 = vmatpush.msra.mxu0 0.0
        %414 = vmatpush.msra.mxu0 0.0
        %415 = vmatpush.msra.mxu0 0.0
        %416 = vmatpush.msra.mxu0 0.0
        %417 = vmatpush.msra.mxu0 0.0
        %418 = vmatpush.msra.mxu0 0.0
        %419 = vmatpush.msra.mxu0 0.0
        %420 = vmatpush.msra.mxu0 0.0
        %421 = vmatpush.msra.mxu0 0.0
        %422 = vmatpush.msra.mxu0 %v381
        %423 = vmatpush.msra.mxu0 %v380
        %424 = vmatpush.msra.mxu0 %v379
        %425 = vmatpush.msra.mxu0 %v378
        %426 = vmatmul.f32.gmra.mxu0 %v408
        %v427 = vpop.f32.mrf.mxu0
        %v428 = vadd.f32 %v384, %v427
        %429 = vdwg.mxu0
        %430 = vst [vmem:[%s218] sm:$0xff] %v428
        %s431 = sand.u32 %s137, 1
        %s432 = scalar_lea.sflag [#allocation3], %s431
        %s433 = sand.u32 %s137, 1
        %s434 = smul.addr %s433, 8
        %s435 = scalar_lea.vmem [#allocation2], %s434
        // Predicated region
        $region41: #{tpu_custom_call.1} parent=39 // pred_check
          %p436 = pneg %p147
        $region42: #{tpu_custom_call.1} parent=39 // pred_check_branch
          %438 = sbr.rel (%p436) target = $region44
        $region43: #{tpu_custom_call.1} parent=39 // pred_region
          %440 = vsyncadd %s432, 0
          %s441 = smul.addr %s19, 8
          %s442 = scalar_lea.hbm %s5, %s441
          %s444 = sshll.u32 %s435, 4
          %s445 = int_to_ptr.vmem [resolvable:$true] %s444
          %s446 = sshll.u32 %s442, 4
          %s447 = int_to_ptr.hbm [resolvable:$true] %s446
          %449 = dma.vmem_to_hbm [thread:$0]  %s445, 128, %s447, %s432
        $region44: #{tpu_custom_call.1} parent=39 // pred_fallthru
          _
      $region40: #{tpu_custom_call.1} parent=5 // pred_fallthru
        _
      %p450 = scmp.le.s32.totalorder 2, %s14
      // Predicated region
      $region45: #{tpu_custom_call.1} parent=5 // pred_check
        %p451 = pneg %p450
      $region46: #{tpu_custom_call.1} parent=5 // pred_check_branch
        %453 = sbr.rel (%p451) target = $region48
      $region47: #{tpu_custom_call.1} parent=5 // pred_region
        %s454 = ssub.s32 %s14, 2
        // Predicated region
        $region49: #{tpu_custom_call.1} parent=47 // pred_check
          %p455 = pneg %p153
        $region50: #{tpu_custom_call.1} parent=47 // pred_check_branch
          %457 = sbr.rel (%p455) target = $region52
        $region51: #{tpu_custom_call.1} parent=47 // pred_region
          %s458 = sand.u32 %s138, 1
          %s459 = scalar_lea.sflag [#allocation3], %s458
          %s460 = sand.u32 %s138, 1
          %s461 = smul.addr %s460, 8
          %s462 = scalar_lea.vmem [#allocation2], %s461
          %464 = dma.done %s459, 128
        $region52: #{tpu_custom_call.1} parent=47 // pred_fallthru
          _
      $region48: #{tpu_custom_call.1} parent=5 // pred_fallthru
        _
    $region6: #{tpu_custom_call.1} parent=1 // loop_footer
      %s18 = sadd.s32 1, %s14
    $region7: #{tpu_custom_call.1} parent=1 // loop_footer_branch
      %13 = sbr.rel target = $region3
    $region8: #{tpu_custom_call.1} parent=1 // loop_exit
      _
    %465 = vsyncpa [#allocation3], 1
    %s466 = scalar_lea.sflag [#allocation3], 1
    %467 = vsyncpa %s466, 1

</llo_original>
